<compile_context>
chip_gen: v6e
topology: v6e:2x2x1
jax: 0.10.0
libtpu: 0.0.40
codegen_flags: <defaults>
</compile_context>

<pallas_src>
import numpy as np
import jax
import jax.numpy as jnp
from jax import lax
from jax.experimental import pallas as pl
from jax.experimental.pallas import tpu as pltpu

LANE = 128                                # one vreg lane width; even => pairs never split a row
TARGET_BLOCK_BYTES = 4 * 1024 * 1024      # ~4 MiB per block (sized in bytes, dtype-aware)
SPLIT_THRESHOLD_BYTES = 2 * 1024 * 1024   # below this a single block is fine
MIN_GRID_STEPS = 4                        # keep both v7x TCs busy on mid-sized inputs
VMEM_LIMIT_BYTES = 48 * 1024 * 1024       # > 4x block bytes double-buffered; < 64 MiB v7x physical


def _rot_kernel(cs_ref, x_ref, o_ref):
    # cs_ref: (2,) f32 SMEM -> [cos(theta), sin(theta)]
    # x_ref / o_ref: (block_rows, LANE) VMEM, interleaved x0,x1 pairs on lanes.
    c = cs_ref[0]
    s = cs_ref[1]
    x = x_ref[...]
    lane = x.shape[-1]
    # The block must cover the full (even) lane axis so no (x0, x1) pair is
    # ever split across a block boundary.
    assert lane % 2 == 0, "lane width must be even"
    # Parity mask / ±sin built on a single (1, lane) row and broadcast into the
    # block multiplies (hoisted off the full-block VALU path; `& 1` not `% 2`).
    lane_ids = lax.broadcasted_iota(jnp.int32, (1, lane), dimension=1)
    is_x0 = (lane_ids & 1) == 0                         # even lanes hold x0
    sign_s = jnp.where(is_x0, s, -s)                    # (1, lane) f32: +s / -s
    # partner[i] = x[i ^ 1]: the other element of the same (x0, x1) pair.
    # With lane == 128 each roll is one within-vreg vrot; the wrapped lanes
    # (0 and lane-1) are never selected by the parity mask.
    nxt = pltpu.roll(x, lane - 1, axis=1)               # nxt[i] = x[i + 1]
    prv = pltpu.roll(x, 1, axis=1)                      # prv[i] = x[i - 1]
    partner = jnp.where(is_x0, nxt, prv)
    # out_even = c*x0 + s*x1 ; out_odd = c*x1 - s*x0  ==  x @ [[c,-s],[s,c]]
    # c, sign_s are f32 -> compute promotes to f32; cast only on the store.
    o_ref[...] = (c * x + sign_s * partner).astype(o_ref.dtype)


def _rotate_pairs_jax(flat, c, s, dtype):
    """Rotate a small flat interleaved [x0, x1, x0, x1, ...] chunk in plain JAX (f32)."""
    t2 = flat.reshape(-1, 2).astype(jnp.float32)
    x0, x1 = t2[:, 0], t2[:, 1]
    out = jnp.stack([c * x0 + s * x1, c * x1 - s * x0], axis=-1)
    return out.reshape(-1).astype(dtype)


def _choose_block_rows(rows, row_bytes):
    total_bytes = rows * row_bytes
    if rows <= 8 or total_bytes <= SPLIT_THRESHOLD_BYTES:
        return rows                        # single full-extent block (always legal)
    target_rows = max(8, (TARGET_BLOCK_BYTES // row_bytes) // 8 * 8)
    # Cap so the grid has >= MIN_GRID_STEPS steps: megacore sharding + overlap.
    cap = max(8, (rows // MIN_GRID_STEPS) // 8 * 8)
    return min(target_rows, cap)


def net_trig_forward(x, theta):
    """x: (..., 2) float array, theta: shape-(1,) parameter -> same shape as x."""
    orig_shape = x.shape
    assert orig_shape[-1] == 2, "NetTrig expects trailing dim 2"
    dtype = x.dtype
    N = int(np.prod(orig_shape))          # total elements = 2*M (always even)

    # cos/sin of the scalar parameter computed once, in float32 (full precision
    # even for bf16 inputs); passed as a tiny (2,) f32 SMEM operand.
    t = theta.reshape(()).astype(jnp.float32)
    c = jnp.cos(t)
    s = jnp.sin(t)
    cs = jnp.stack([c, s])                # (2,) f32

    flat = x.reshape(-1)                  # free: contiguous, interleaved pairs

    # LANE-aligned prefix streams through the kernel zero-copy; only the
    # < LANE-element tail is handled in plain JAX.
    n_main = (N // LANE) * LANE
    n_tail = N - n_main

    if n_main == 0:
        # Tiny input: no full row to stream.
        return _rotate_pairs_jax(flat, c, s, dtype).reshape(orig_shape)

    main = flat[:n_main] if n_tail else flat
    rows = n_main // LANE
    x2d = main.reshape(rows, LANE)

    itemsize = x.dtype.itemsize
    block_rows = _choose_block_rows(rows, LANE * itemsize)
    grid = (pl.cdiv(rows, block_rows),)

    cost = pl.CostEstimate(
        flops=3 * n_main,                           # ~2 mul + 1 add per element
        transcendentals=0,
        bytes_accessed=2 * n_main * itemsize,       # 1 read + 1 write of x
    )

    out2d = pl.pallas_call(
        _rot_kernel,
        out_shape=jax.ShapeDtypeStruct((rows, LANE), dtype),
        grid=grid,
        in_specs=[
            pl.BlockSpec(memory_space=pltpu.MemorySpace.SMEM),    # [cos, sin] f32
            pl.BlockSpec((block_rows, LANE), lambda i: (i, 0)),   # x tile
        ],
        out_specs=pl.BlockSpec((block_rows, LANE), lambda i: (i, 0)),
        compiler_params=pltpu.CompilerParams(
            dimension_semantics=("parallel",),
            vmem_limit_bytes=VMEM_LIMIT_BYTES),
        cost_estimate=cost,
    )(cs, x2d)

    out_flat = out2d.reshape(-1)
    if n_tail:
        # TODO(synk): fold the tail into a masked store on the last block to
        # avoid this output concat copy entirely.
        tail_out = _rotate_pairs_jax(flat[n_main:], c, s, dtype)
        out_flat = jnp.concatenate([out_flat, tail_out])
    return out_flat.reshape(orig_shape)


def _reference(x, theta):
    t = theta[0].astype(jnp.float32)
    m = jnp.array([[jnp.cos(t), -jnp.sin(t)],
                   [jnp.sin(t),  jnp.cos(t)]], dtype=jnp.float32)
    return (x.astype(jnp.float32) @ m).astype(x.dtype)


if __name__ == "__main__":
    root = jax.random.PRNGKey(0)
    k0, k1, k2, k3, k4, k5 = jax.random.split(root, 6)

    # Small shape consistent with the module (trailing dim 2).
    x = jax.random.normal(k0, (2, 4, 16, 2), dtype=jnp.float32)

    # Parameter exactly as in NetTrig.__init__: theta = zeros(1) -> identity rotation.
    theta0 = jnp.zeros((1,), dtype=jnp.float32)
    out0 = jax.block_until_ready(net_trig_forward(x, theta0))
    assert out0.shape == x.shape
    np.testing.assert_allclose(np.asarray(out0), np.asarray(_reference(x, theta0)),
                               rtol=1e-6, atol=1e-6)

    # Non-trivial rotation angle to validate the math path.
    theta1 = jnp.array([0.3], dtype=jnp.float32)
    out1 = jax.block_until_ready(net_trig_forward(x, theta1))
    np.testing.assert_allclose(np.asarray(out1), np.asarray(_reference(x, theta1)),
                               rtol=1e-5, atol=1e-5)

    # Ragged tiny case (N < 128): pure-JAX fallback path.
    xr = jax.random.normal(k1, (3, 5, 2), dtype=jnp.float32)
    outr = jax.block_until_ready(net_trig_forward(xr, theta1))
    np.testing.assert_allclose(np.asarray(outr), np.asarray(_reference(xr, theta1)),
                               rtol=1e-5, atol=1e-5)

    # Ragged case with an aligned prefix + small tail (N = 130).
    xt = jax.random.normal(k2, (5, 13, 2), dtype=jnp.float32)
    outt = jax.block_until_ready(net_trig_forward(xt, theta1))
    np.testing.assert_allclose(np.asarray(outt), np.asarray(_reference(xt, theta1)),
                               rtol=1e-5, atol=1e-5)

    # Multi-row (sublane-dense) single-block case.
    xm = jax.random.normal(k3, (8, 512, 2), dtype=jnp.float32)
    outm = jax.block_until_ready(net_trig_forward(xm, theta1))
    np.testing.assert_allclose(np.asarray(outm), np.asarray(_reference(xm, theta1)),
                               rtol=1e-5, atol=1e-5)

    # Multi-block / multi-grid-step case (4 MiB -> 4 grid steps, megacore split).
    xb = jax.random.normal(k4, (64, 8192, 2), dtype=jnp.float32)
    outb = jax.block_until_ready(net_trig_forward(xb, theta1))
    np.testing.assert_allclose(np.asarray(outb), np.asarray(_reference(xb, theta1)),
                               rtol=1e-5, atol=1e-5)

    # bf16 input: coefficients stay f32 internally, only the store is bf16.
    xh = jax.random.normal(k5, (4, 64, 2), dtype=jnp.float32).astype(jnp.bfloat16)
    outh = jax.block_until_ready(net_trig_forward(xh, theta1))
    np.testing.assert_allclose(np.asarray(outh, dtype=np.float32),
                               np.asarray(_reference(xh, theta1), dtype=np.float32),
                               rtol=2e-2, atol=2e-2)

    print("KERNEL_OK")
</pallas_src>

<mosaic_0001>
module attributes {stable_mosaic.version = 11 : i64} {
  func.func @_rot_kernel(%arg0: i32, %arg1: memref<2xf32, #tpu.memory_space<smem>>, %arg2: memref<2x128xf32, #tpu.memory_space<vmem>>, %arg3: memref<2x128xf32, #tpu.memory_space<vmem>>) attributes {dimension_semantics = [#tpu.dimension_semantics<parallel>], iteration_bounds = array<i64: 1>, scalar_prefetch = 0 : i64, scratch_operands = 0 : i64, tpu.core_type = #tpu.core_type<tc>, window_params = [{transform_indices = @transform_0, window_bounds = array<i64: 2>}, {transform_indices = @transform_1, window_bounds = array<i64: 2, 128>}, {transform_indices = @transform_2, window_bounds = array<i64: 2, 128>}]} {
    %c0 = arith.constant 0 : index
    %0 = memref.load %arg1[%c0] : memref<2xf32, #tpu.memory_space<smem>>
    %c1 = arith.constant 1 : index
    %1 = memref.load %arg1[%c1] : memref<2xf32, #tpu.memory_space<smem>>
    %c0_0 = arith.constant 0 : index
    %c0_1 = arith.constant 0 : index
    %2 = vector.load %arg2[%c0_0, %c0_1] : memref<2x128xf32, #tpu.memory_space<vmem>>, vector<2x128xf32>
    %3 = tpu.iota {dimensions = array<i32: 1>} : vector<1x128xi32>
    %c1_i32 = arith.constant 1 : i32
    %4 = vector.broadcast %c1_i32 : i32 to vector<1x128xi32>
    %5 = arith.andi %3, %4 : vector<1x128xi32>
    %c0_i32 = arith.constant 0 : i32
    %6 = vector.broadcast %c0_i32 : i32 to vector<1x128xi32>
    %7 = arith.cmpi eq, %5, %6 : vector<1x128xi32>
    %cst = arith.constant 0.000000e+00 : f32
    %8 = arith.subf %cst, %1 : f32
    %9 = vector.broadcast %1 : f32 to vector<1x128xf32>
    %10 = vector.broadcast %8 : f32 to vector<1x128xf32>
    %11 = arith.select %7, %9, %10 : vector<1x128xi1>, vector<1x128xf32>
    %c127_i32 = arith.constant 127 : i32
    %12 = tpu.dynamic_rotate %2 by %c127_i32 dim 1 : vector<2x128xf32>, i32 -> vector<2x128xf32>
    %c1_i32_2 = arith.constant 1 : i32
    %13 = tpu.dynamic_rotate %2 by %c1_i32_2 dim 1 : vector<2x128xf32>, i32 -> vector<2x128xf32>
    %14 = vector.shape_cast %7 : vector<1x128xi1> to vector<1x128xi1>
    %15 = vector.broadcast %14 : vector<1x128xi1> to vector<2x128xi1>
    %16 = arith.select %15, %12, %13 : vector<2x128xi1>, vector<2x128xf32>
    %17 = vector.broadcast %0 : f32 to vector<2x128xf32>
    %18 = arith.mulf %17, %2 : vector<2x128xf32>
    %19 = vector.broadcast %11 : vector<1x128xf32> to vector<2x128xf32>
    %20 = arith.mulf %19, %16 : vector<2x128xf32>
    %21 = arith.addf %18, %20 : vector<2x128xf32>
    %c0_3 = arith.constant 0 : index
    %c0_4 = arith.constant 0 : index
    %22 = vector.load %arg3[%c0_3, %c0_4] : memref<2x128xf32, #tpu.memory_space<vmem>>, vector<2x128xf32>
    tpu.vector_store %arg3[%c0_3, %c0_4], %21 {strides = array<i32>} : memref<2x128xf32, #tpu.memory_space<vmem>>, vector<2x128xf32>,
    return
  }
  func.func @transform_0(%arg0: i32) -> i32 {
    %c0_i32 = arith.constant 0 : i32
    %c0_i32_0 = arith.constant 0 : i32
    return %c0_i32 : i32
  }
  func.func @transform_1(%arg0: i32) -> (i32, i32) {
    %c0_i32 = arith.constant 0 : i32
    %c0_i32_0 = arith.constant 0 : i32
    return %arg0, %c0_i32 : i32, i32
  }
  func.func @transform_2(%arg0: i32) -> (i32, i32) {
    %c0_i32 = arith.constant 0 : i32
    %c0_i32_0 = arith.constant 0 : i32
    return %arg0, %c0_i32 : i32, i32
  }
}

</mosaic_0001>

<llo_original>
// kernel: tpu_custom_call.1
$region0: #{tpu_custom_call.1}
  #allocation0 [shape = 'u32[]', space=smem, size = 0x4, offset = 0x4, fixed_abs, tag = 'smem constant byte address 0x4 - core index']
  #allocation1 [shape = 'u32[144,128]{1,0:T(1,128)}', space=vmem, size = 0x12000, scoped, tag = 'internal scratch']
  %s0 = inlined_call_operand.hbm [shape: f32[2], index: 0, kind: input, shape index: {}]
  %s1 = inlined_call_operand.hbm [shape: f32[2,128], index: 1, kind: input, shape index: {}]
  %s2 = inlined_call_operand.hbm [shape: f32[2,128], index: 2, kind: output, shape index: {}]
  %s3 = sld [smem:[#allocation0]]
  $region26: #{tpu_custom_call.1} parent=0
    _
  %s5 = ssub.s32 1, %s3
  %s6 = scalar_select 0, %s5, %s3
  $region1: #{tpu_custom_call.1} parent=0
    #allocation2 [shape = 'u8[512]{0}', space=smem, size = 0x200, scoped, tag = 'input window, operand 0, single buffered']
    #allocation3 [shape = 's32[1]{0}', space=sflag, size = 0x4, scoped, tag = 'scoped memory for tpu_custom_call.1']
    #allocation4 [shape = 's32[1]{0}', space=sflag, size = 0x4, scoped, tag = 'scoped memory for tpu_custom_call.1']
    #allocation5 [shape = 's32[1]{0}', space=sflag, size = 0x4, scoped, tag = 'scoped memory for tpu_custom_call.1']
    #allocation6 [shape = 'u8[1024]{0}', space=vmem, size = 0x400, scoped, tag = 'input window, operand 1, single buffered']
    #allocation7 [shape = 'u8[1024]{0}', space=vmem, size = 0x400, scoped, tag = 'output window, operand 0, single buffered']
    %7 = vsyncpa [#allocation5], 0
    %8 = vsyncpa [#allocation3], 0
    %9 = vsyncpa [#allocation4], 0
    // Predicated region
    $region2: #{tpu_custom_call.1} parent=1 // pred_check
      _
    $region3: #{tpu_custom_call.1} parent=1 // pred_check_branch
      %11 = sbr.rel (0) target = $region5
    $region4: #{tpu_custom_call.1} parent=1 // pred_region
      %s13 = ssub.s32 16, 16
      %14 = vsyncadd [#allocation5], %s13
      %17 = dma.hbm_to_smem %s0, 16, [#allocation2], [#allocation5]
    $region5: #{tpu_custom_call.1} parent=1 // pred_fallthru
      _
    // Predicated region
    $region6: #{tpu_custom_call.1} parent=1 // pred_check
      _
    $region7: #{tpu_custom_call.1} parent=1 // pred_check_branch
      %19 = sbr.rel (0) target = $region9
    $region8: #{tpu_custom_call.1} parent=1 // pred_region
      %s21 = ssub.s32 32, 32
      %22 = vsyncadd [#allocation3], %s21
      %s24 = sshll.u32 [#allocation6], 4
      %s25 = int_to_ptr.vmem [resolvable:$true] %s24
      %27 = dma.hbm_to_vmem [thread:$0]  %s1, 32, %s25, [#allocation3]
    $region9: #{tpu_custom_call.1} parent=1 // pred_fallthru
      _
    // Predicated region
    $region10: #{tpu_custom_call.1} parent=1 // pred_check
      _
    $region11: #{tpu_custom_call.1} parent=1 // pred_check_branch
      %29 = sbr.rel (0) target = $region13
    $region12: #{tpu_custom_call.1} parent=1 // pred_region
      %30 = dma.done [#allocation5], 16
    $region13: #{tpu_custom_call.1} parent=1 // pred_fallthru
      _
    // Predicated region
    $region14: #{tpu_custom_call.1} parent=1 // pred_check
      _
    $region15: #{tpu_custom_call.1} parent=1 // pred_check_branch
      %32 = sbr.rel (0) target = $region17
    $region16: #{tpu_custom_call.1} parent=1 // pred_region
      %33 = dma.done [#allocation3], 32
    $region17: #{tpu_custom_call.1} parent=1 // pred_fallthru
      _
    %34 = sfence
    %s35 = sld [smem:[#allocation2]]
    %s36 = sld [smem:[#allocation2 + $0x1]]
    %v37 = vld [vmem:[#allocation6] sm:$0x3]
    %v38 = vlaneseq
    %v39 = vand.u32 %v38, 127
    %v40 = vand.u32 %v39, 1
    %vm41 = vcmp.eq.s32.totalorder %v40, 0
    %s42 = ssub.f32 0.0, %s36
    %v43 = vstv %s36
    %v44 = vstv %s42
    %v45 = vsel %vm41, %v43, %v44
    %46 = vrot.lane.b32.xlu0 %v37, 127
    %v47 = vpop.permute.xlu0 %46
    %48 = vrot.lane.b32.xlu0 %v37, 1
    %v49 = vpop.permute.xlu0 %48
    %v50 = vsel %vm41, 1, 0
    %vm51 = vcmp.eq.s32.totalorder %v50, 1
    %v52 = vsel %vm51, %v47, %v49
    %v53 = vstv %s35
    %v54 = vmul.f32 %v53, %v37
    %v55 = vmul.f32 %v45, %v52
    %v56 = vadd.f32 %v54, %v55
    %57 = vst [vmem:[#allocation7] sm:$0x3] %v56
    // Predicated region
    $region18: #{tpu_custom_call.1} parent=1 // pred_check
      _
    $region19: #{tpu_custom_call.1} parent=1 // pred_check_branch
      %59 = sbr.rel (0) target = $region21
    $region20: #{tpu_custom_call.1} parent=1 // pred_region
      %s61 = ssub.s32 32, 32
      %62 = vsyncadd [#allocation4], %s61
      %s64 = sshll.u32 [#allocation7], 4
      %s65 = int_to_ptr.vmem [resolvable:$true] %s64
      %67 = dma.vmem_to_hbm [thread:$0]  %s65, 32, %s2, [#allocation4]
    $region21: #{tpu_custom_call.1} parent=1 // pred_fallthru
      _
    // Predicated region
    $region22: #{tpu_custom_call.1} parent=1 // pred_check
      _
    $region23: #{tpu_custom_call.1} parent=1 // pred_check_branch
      %69 = sbr.rel (0) target = $region25
    $region24: #{tpu_custom_call.1} parent=1 // pred_region
      %70 = dma.done [#allocation4], 32
    $region25: #{tpu_custom_call.1} parent=1 // pred_fallthru
      _
    %71 = vsyncpa [#allocation3], 1
    %72 = vsyncpa [#allocation4], 1
    %73 = vsyncpa [#allocation5], 1

</llo_original>
